<compile_context>
chip_gen: v7x
topology: tpu7x:2x2x1
jax: 0.10.0
libtpu: 0.0.40
codegen_flags: <defaults>
</compile_context>

<pallas_src>
import functools

import jax
import jax.numpy as jnp
from jax.experimental import pallas as pl
from jax.experimental.pallas import tpu as pltpu


def _make_kernel(eps: float, n_rows: int, n_cls: int, block_n: int):
    # Fold sign + eps + mean normalizations into trace-time constants.
    w_all = -eps / float(n_rows * n_cls)          # weight of every logp[i, j]
    w_pick = -(1.0 - eps) / float(n_rows)         # extra weight of logp[i, t_i]
    lse_coeff = w_all * float(n_cls) + w_pick     # total -lse coefficient per row

    def kernel(preds_ref, targets_ref, out_ref):
        i = pl.program_id(0)

        x = preds_ref[...].astype(jnp.float32)            # (BN, C)
        tgt = targets_ref[...]                            # (BN, 1) int32

        # Row-wise logsumexp (numerically stable), only (BN, 1) temporaries.
        m = jnp.max(x, axis=-1, keepdims=True)            # (BN, 1)
        lse = m + jnp.log(jnp.sum(jnp.exp(x - m), axis=-1, keepdims=True))

        # Fused "sum of logp" + "picked logp" as a single weighted reduction:
        #   contrib_i = sum_j x[i,j]*(w_all + w_pick*[j==t_i]) - lse_coeff*lse_i
        col = jax.lax.broadcasted_iota(jnp.int32, (1, n_cls), 1)   # (1, C)
        w = jnp.where(col == tgt, w_all + w_pick, w_all)           # (BN, C)
        s = jnp.sum(x * w, axis=-1, keepdims=True)                 # (BN, 1)
        contrib = s - lse_coeff * lse                              # (BN, 1)

        # Mask padded rows of the last (partial) tile.  Must stay a select
        # (NOT a multiply): padded-row garbage may be Inf/NaN.
        row = jax.lax.broadcasted_iota(jnp.int32, (block_n, 1), 0) + i * block_n
        contrib = jnp.where(row < n_rows, contrib, 0.0)

        partial = jnp.sum(contrib)                                 # scalar f32
        # Lane-dense unmasked store of this tile's partial sum; the wrapper
        # reads element [i, 0, 0] of each block and sums.
        out_ref[...] = jnp.full((1, 8, 128), partial, dtype=jnp.float32)

    return kernel


def _vmem_capacity_bytes() -> int:
    try:
        return int(pltpu.get_tpu_info().vmem_capacity_bytes)
    except Exception:
        return 64 * 1024 * 1024       # conservative (v7x-sized) fallback


def _choose_tiling(n: int, c: int, itemsize: int):
    """Return (vmem_limit_bytes, block_n) sized for the current TPU generation."""
    vmem = _vmem_capacity_bytes()
    if vmem >= 96 * 1024 * 1024:      # v5e / v6e: 128 MiB VMEM per core
        vmem_limit = 64 * 1024 * 1024
        bn_cap = 8192
    else:                             # v7x: 64 MiB VMEM per core
        vmem_limit = 32 * 1024 * 1024
        bn_cap = 2048
    # Per-row VMEM cost: double-buffered native logits tile + ~4 tile-sized f32
    # temporaries (f32 upcast, exp(x-m), weights, weighted product) + targets.
    per_row = c * (2 * itemsize + 4 * 4) + 2 * 4
    bn = int((vmem_limit * 7) // (10 * per_row))      # ~70% of the scoped limit
    bn = min(bn, bn_cap)
    sublane = {1: 32, 2: 16}.get(itemsize, 8)         # dtype sublane multiple
    bn -= bn % sublane
    bn = max(bn, sublane)
    if bn >= n:
        bn = n                        # single full-extent block (always legal)
    return vmem_limit, bn


@functools.partial(jax.jit, static_argnames=("eps", "block_n"))
def label_smooth_cross_entropy(preds, targets, eps, block_n=None):
    """preds: (N, C) f32/bf16 logits; targets: (N,) int class ids; eps: python float."""
    n, c = preds.shape
    targets2d = targets.astype(jnp.int32).reshape(n, 1)

    vmem_limit, auto_bn = _choose_tiling(n, c, preds.dtype.itemsize)
    bn = auto_bn if block_n is None else min(int(block_n), n)
    num_tiles = pl.cdiv(n, bn)

    kernel = _make_kernel(float(eps), n, c, bn)

    cost = pl.CostEstimate(
        flops=int(6 * n * c),
        transcendentals=int(n * c),
        bytes_accessed=int(n * c * preds.dtype.itemsize)
        + int(n * 4)
        + int(num_tiles * 8 * 128 * 4),
    )

    partials = pl.pallas_call(
        kernel,
        out_shape=jax.ShapeDtypeStruct((num_tiles, 8, 128), jnp.float32),
        grid_spec=pl.GridSpec(
            grid=(num_tiles,),
            in_specs=[
                pl.BlockSpec((bn, c), lambda i: (i, 0)),      # logits tile
                pl.BlockSpec((bn, 1), lambda i: (i, 0)),      # targets tile
            ],
            # One private, lane-dense block per grid step -> safe under
            # "parallel" (megacore on v7x), no cross-step read-modify-write.
            out_specs=pl.BlockSpec((1, 8, 128), lambda i: (i, 0, 0)),
        ),
        compiler_params=pltpu.CompilerParams(
            dimension_semantics=("parallel",),
            vmem_limit_bytes=vmem_limit,
        ),
        cost_estimate=cost,
    )(preds, targets2d)

    # Final tiny reduction over per-tile partials.
    return jnp.sum(partials[:, 0, 0])


def _reference(preds, targets, eps):
    n, c = preds.shape
    logp = jax.nn.log_softmax(preds.astype(jnp.float32), axis=-1)
    loss = -jnp.mean(jnp.sum(logp, axis=-1))
    nll = -jnp.mean(logp[jnp.arange(n), targets])
    return eps * (loss / c) + (1.0 - eps) * nll


if __name__ == "__main__":
    key = jax.random.PRNGKey(0)
    eps = 0.1

    # Case 1: small shape consistent with the module (batch=8, classes=32).
    k1, k2, k3, k4, k5, k6 = jax.random.split(key, 6)
    preds1 = jax.random.normal(k1, (8, 32), dtype=jnp.float32)
    targets1 = jax.random.randint(k2, (8,), 0, 32, dtype=jnp.int32)
    out1 = jax.block_until_ready(label_smooth_cross_entropy(preds1, targets1, eps))
    ref1 = _reference(preds1, targets1, eps)
    assert jnp.allclose(out1, ref1, atol=1e-4, rtol=1e-5), (out1, ref1)

    # Case 2: exercise batch tiling + partial-last-tile masking (N=20, BN=8 -> grid=3).
    preds2 = jax.random.normal(k3, (20, 128), dtype=jnp.float32)
    targets2 = jax.random.randint(k4, (20,), 0, 128, dtype=jnp.int32)
    out2 = jax.block_until_ready(
        label_smooth_cross_entropy(preds2, targets2, eps, block_n=8)
    )
    ref2 = _reference(preds2, targets2, eps)
    assert jnp.allclose(out2, ref2, atol=1e-4, rtol=1e-5), (out2, ref2)

    # Case 3: bf16 logits, sublane-16 tiles, partial last tile (N=24, BN=16 -> grid=2).
    preds3 = jax.random.normal(k5, (24, 256), dtype=jnp.bfloat16)
    targets3 = jax.random.randint(k6, (24,), 0, 256, dtype=jnp.int32)
    out3 = jax.block_until_ready(
        label_smooth_cross_entropy(preds3, targets3, eps, block_n=16)
    )
    ref3 = _reference(preds3, targets3, eps)
    assert jnp.allclose(out3, ref3, atol=1e-3, rtol=1e-4), (out3, ref3)

    print("KERNEL_OK")
</pallas_src>

<mosaic_0001>
module attributes {stable_mosaic.version = 11 : i64} {
  func.func @kernel(%arg0: i32, %arg1: memref<8x32xf32, #tpu.memory_space<vmem>>, %arg2: memref<8x1xi32, #tpu.memory_space<vmem>>, %arg3: memref<1x8x128xf32, #tpu.memory_space<vmem>>) attributes {dimension_semantics = [#tpu.dimension_semantics<parallel>], iteration_bounds = array<i64: 1>, scalar_prefetch = 0 : i64, scratch_operands = 0 : i64, tpu.core_type = #tpu.core_type<tc>, window_params = [{transform_indices = @transform_0, window_bounds = array<i64: 8, 32>}, {transform_indices = @transform_1, window_bounds = array<i64: 8, 1>}, {transform_indices = @transform_2, window_bounds = array<i64: 1, 8, 128>}]} {
    %c0 = arith.constant 0 : index
    %c0_0 = arith.constant 0 : index
    %0 = vector.load %arg1[%c0, %c0_0] : memref<8x32xf32, #tpu.memory_space<vmem>>, vector<8x32xf32>
    %c0_1 = arith.constant 0 : index
    %c0_2 = arith.constant 0 : index
    %1 = vector.load %arg2[%c0_1, %c0_2] : memref<8x1xi32, #tpu.memory_space<vmem>>, vector<8x1xi32>
    %cst = arith.constant dense<0xFF800000> : vector<8xf32>
    %2 = vector.multi_reduction <maximumf>, %0, %cst [1] : vector<8x32xf32> to vector<8xf32>
    %3 = vector.shape_cast %2 : vector<8xf32> to vector<8x1xf32>
    %4 = vector.broadcast %3 : vector<8x1xf32> to vector<8x32xf32>
    %5 = arith.subf %0, %4 : vector<8x32xf32>
    %6 = math.exp %5 : vector<8x32xf32>
    %cst_3 = arith.constant dense<0.000000e+00> : vector<8xf32>
    %7 = vector.multi_reduction <add>, %6, %cst_3 [1] : vector<8x32xf32> to vector<8xf32>
    %8 = vector.shape_cast %7 : vector<8xf32> to vector<8x1xf32>
    %9 = math.log %8 : vector<8x1xf32>
    %10 = arith.addf %3, %9 : vector<8x1xf32>
    %11 = tpu.iota {dimensions = array<i32: 1>} : vector<1x32xi32>
    %12 = vector.broadcast %11 : vector<1x32xi32> to vector<8x32xi32>
    %13 = vector.broadcast %1 : vector<8x1xi32> to vector<8x32xi32>
    %14 = arith.cmpi eq, %12, %13 : vector<8x32xi32>
    %cst_4 = arith.constant -0.112890624 : f32
    %cst_5 = arith.constant -3.906250e-04 : f32
    %15 = vector.broadcast %cst_4 : f32 to vector<8x32xf32>
    %16 = vector.broadcast %cst_5 : f32 to vector<8x32xf32>
    %17 = arith.select %14, %15, %16 : vector<8x32xi1>, vector<8x32xf32>
    %18 = arith.mulf %0, %17 : vector<8x32xf32>
    %cst_6 = arith.constant dense<0.000000e+00> : vector<8xf32>
    %19 = vector.multi_reduction <add>, %18, %cst_6 [1] : vector<8x32xf32> to vector<8xf32>
    %20 = vector.shape_cast %19 : vector<8xf32> to vector<8x1xf32>
    %cst_7 = arith.constant -1.250000e-01 : f32
    %21 = vector.broadcast %cst_7 : f32 to vector<8x1xf32>
    %22 = arith.mulf %21, %10 : vector<8x1xf32>
    %23 = arith.subf %20, %22 : vector<8x1xf32>
    %24 = tpu.iota {dimensions = array<i32: 0>} : vector<8x1xi32>
    %c8_i32 = arith.constant 8 : i32
    %25 = arith.muli %arg0, %c8_i32 : i32
    %26 = vector.broadcast %25 : i32 to vector<8x1xi32>
    %27 = arith.addi %24, %26 : vector<8x1xi32>
    %c8_i32_8 = arith.constant 8 : i32
    %28 = vector.broadcast %c8_i32_8 : i32 to vector<8x1xi32>
    %29 = arith.cmpi slt, %27, %28 : vector<8x1xi32>
    %cst_9 = arith.constant 0.000000e+00 : f32
    %30 = vector.broadcast %cst_9 : f32 to vector<8x1xf32>
    %31 = arith.select %29, %23, %30 : vector<8x1xi1>, vector<8x1xf32>
    %32 = vector.shape_cast %31 : vector<8x1xf32> to vector<1x8x1xf32>
    %cst_10 = arith.constant dense<0.000000e+00> : vector<1xf32>
    %33 = vector.multi_reduction <add>, %32, %cst_10 [1, 2] : vector<1x8x1xf32> to vector<1xf32>
    %34 = vector.shape_cast %33 : vector<1xf32> to vector<1x1x1xf32>
    %35 = vector.extract %34[0, 0, 0] : f32 from vector<1x1x1xf32>
    %36 = vector.broadcast %35 : f32 to vector<1x8x128xf32>
    %c0_11 = arith.constant 0 : index
    %c0_12 = arith.constant 0 : index
    %c0_13 = arith.constant 0 : index
    %37 = vector.load %arg3[%c0_11, %c0_12, %c0_13] : memref<1x8x128xf32, #tpu.memory_space<vmem>>, vector<1x8x128xf32>
    tpu.vector_store %arg3[%c0_11, %c0_12, %c0_13], %36 {strides = array<i32>} : memref<1x8x128xf32, #tpu.memory_space<vmem>>, vector<1x8x128xf32>,
    return
  }
  func.func @transform_0(%arg0: i32) -> (i32, i32) {
    %c0_i32 = arith.constant 0 : i32
    %c0_i32_0 = arith.constant 0 : i32
    return %arg0, %c0_i32 : i32, i32
  }
  func.func @transform_1(%arg0: i32) -> (i32, i32) {
    %c0_i32 = arith.constant 0 : i32
    %c0_i32_0 = arith.constant 0 : i32
    return %arg0, %c0_i32 : i32, i32
  }
  func.func @transform_2(%arg0: i32) -> (i32, i32, i32) {
    %c0_i32 = arith.constant 0 : i32
    %c0_i32_0 = arith.constant 0 : i32
    %c0_i32_1 = arith.constant 0 : i32
    return %arg0, %c0_i32, %c0_i32_0 : i32, i32, i32
  }
}

</mosaic_0001>

<llo_original>
// kernel: label_smooth_cross_entropy.1
$region0: #{label_smooth_cross_entropy.1}
  #allocation0 [shape = 'u32[]', space=smem, size = 0x4, offset = 0x4, fixed_abs, tag = 'smem constant byte address 0x4 - core index']
  #allocation1 [shape = 'u32[144,128]{1,0:T(1,128)}', space=vmem, size = 0x12000, scoped, tag = 'internal scratch']
  %s0 = inlined_call_operand.vmem [shape: f32[8,32], index: 0, kind: input, shape index: {}]
  %s1 = inlined_call_operand.vmem [shape: s32[8,1], index: 1, kind: input, shape index: {}]
  %s2 = inlined_call_operand.vmem [shape: f32[1,8,128], index: 2, kind: output, shape index: {}]
  %s3 = sld [smem:[#allocation0]]
  $region18: #{label_smooth_cross_entropy.1} parent=0
    _
  %s5 = ssub.s32 1, %s3
  %s6 = scalar_select 0, %s5, %s3
  // Predicated region
  $region2: #{label_smooth_cross_entropy.1} parent=0 // pred_check
    _
  $region3: #{label_smooth_cross_entropy.1} parent=0 // pred_check_branch
    %8 = sbr.rel (0) target = $region5
  $region4: #{label_smooth_cross_entropy.1} parent=0 // pred_region
    _
  $region5: #{label_smooth_cross_entropy.1} parent=0 // pred_fallthru
    _
  // Predicated region
  $region6: #{label_smooth_cross_entropy.1} parent=0 // pred_check
    _
  $region7: #{label_smooth_cross_entropy.1} parent=0 // pred_check_branch
    %10 = sbr.rel (0) target = $region9
  $region8: #{label_smooth_cross_entropy.1} parent=0 // pred_region
    _
  $region9: #{label_smooth_cross_entropy.1} parent=0 // pred_fallthru
    _
  %v11 = vld [vmem:[%s0] sm:$0xff]
  %v12 = vld [vmem:[%s1] sm:$0xff]
  %vm13 = vcmask 261120
  %v14 = vsel %vm13, %v11, -inf
  %15 = vmax.xlane.f32.xlu0 %v14
  %v16 = vpop.xlane.xlu0 %15
  %v17 = vsub.f32 %v11, %v16
  %v18 = vmul.f32 %v17, 1.442695
  %v19 = vpow.pop %v18
  %v20 = vsel %vm13, %v19, 0.0
  %21 = vadd.xlane.f32.xlu0 %v20
  %v22 = vpop.xlane.xlu0 %21
  %v23 = vlog2.pop %v22
  %v24 = vmul.f32 %v23, 0.6931472
  %v25 = vadd.f32 %v16, %v24
  %v26 = vlaneseq
  %v27 = vand.u32 %v26, 127
  %28 = vset.pattern.permute.xlu0 0
  %29 = vperm.xlu0 %28, %v12
  %v30 = vpop.permute.xlu0 %29
  %vm31 = vcmp.eq.s32.totalorder %v27, %v30
  %v32 = vsel %vm31, -0.11289062, -0.000390625
  %v33 = vmul.f32 %v11, %v32
  %v34 = vsel %vm13, %v33, 0.0
  %35 = vadd.xlane.f32.xlu0 %v34
  %v36 = vpop.xlane.xlu0 %35
  %v37 = vmul.f32 %v25, -0.125
  %v38 = vsub.f32 %v36, %v37
  %v39 = vlaneseq
  %v40 = vshrl.u32 %v39, 7
  %s41 = smul.u32 0, 8
  %v42 = vstv %s41
  %v43 = vadd.s32 %v40, %v42
  %vm44 = vcmp.lt.s32.totalorder %v43, 8
  %v45 = vsel %vm44, %v38, 0.0
  %vm46 = vcmask 7168
  %v47 = vsel %vm46, %v45, 0.0
  %48 = vadd.xlane.f32.xlu0 %v47
  %v49 = vpop.xlane.xlu0 %48
  %v50 = vrot.slane %v49, 4
  %v51 = vadd.f32 %v49, %v50
  %v52 = vrot.slane %v51, 2
  %v53 = vadd.f32 %v51, %v52
  %v54 = vrot.slane %v53, 1
  %v55 = vadd.f32 %v53, %v54
  %s56 = vtos %v55
  %v57 = vstv %s56
  %58 = vst [vmem:[%s2] sm:$0xff] %v57
  // Predicated region
  $region10: #{label_smooth_cross_entropy.1} parent=0 // pred_check
    _
  $region11: #{label_smooth_cross_entropy.1} parent=0 // pred_check_branch
    %60 = sbr.rel (0) target = $region13
  $region12: #{label_smooth_cross_entropy.1} parent=0 // pred_region
    _
  $region13: #{label_smooth_cross_entropy.1} parent=0 // pred_fallthru
    _
  // Predicated region
  $region14: #{label_smooth_cross_entropy.1} parent=0 // pred_check
    _
  $region15: #{label_smooth_cross_entropy.1} parent=0 // pred_check_branch
    %62 = sbr.rel (0) target = $region17
  $region16: #{label_smooth_cross_entropy.1} parent=0 // pred_region
    _
  $region17: #{label_smooth_cross_entropy.1} parent=0 // pred_fallthru
    _

</llo_original>
